<compile_context>
chip_gen: v6e
topology: v6e:2x2x1
jax: 0.10.0
libtpu: 0.0.40
codegen_flags: <defaults>
</compile_context>

<pallas_src>
import functools
import math

import jax
import jax.numpy as jnp
from jax.experimental import pallas as pl
from jax.experimental.pallas import tpu as pltpu


# Per-generation constants for the roofline gate / tile selection.
_CHIP_PARAMS = {
    "v5": dict(mxu_flops=197e12, hbm_bw=8.2e11, resident_tile=128),
    "v6": dict(mxu_flops=918e12, hbm_bw=1.35e12, resident_tile=256),
    "v7": dict(mxu_flops=996e12, hbm_bw=3.2e12, resident_tile=256),
    "unknown": dict(mxu_flops=197e12, hbm_bw=8.0e11, resident_tile=128),
}
# Effective per-row cost floor of the latency/issue-bound DMA gather (seconds).
_ROW_DMA_FLOOR_S = 8e-8


def _tpu_generation():
    try:
        kind = jax.devices()[0].device_kind.lower()
    except Exception:
        kind = ""
    if "v5" in kind:
        return "v5"
    if "v7" in kind or "7x" in kind:
        return "v7"
    if "v6" in kind or "trillium" in kind:
        return "v6"
    return "unknown"


def _vmem_capacity_bytes():
    try:
        return int(pltpu.get_tpu_info().vmem_capacity_bytes)
    except Exception:
        return 64 * 1024 * 1024  # safe lower bound (v7x per-core VMEM)


# ---------------------------------------------------------------------------
# Path 1: resident table in VMEM + one-hot matmul on the MXU.
# ---------------------------------------------------------------------------
def _onehot_kernel(tok_ref, table_ref, out_ref, *, scale):
    # tok_ref:   (T, 1) int32 token ids for this tile.
    # table_ref: (V, E) full embedding table, resident (single-buffered) in VMEM.
    # out_ref:   (T, E) lane-dense output tile.
    T = tok_ref.shape[0]
    V = table_ref.shape[0]
    tok = tok_ref[...]                                            # (T, 1)
    vocab_iota = jax.lax.broadcasted_iota(jnp.int32, (T, V), 1)   # (T, V)
    # One-hot in the table dtype (bf16/f32, never int) -> valid MXU operand on
    # v5e/v6e/v7x.
    onehot = (tok == vocab_iota).astype(table_ref.dtype)          # (T, V)
    acc = jnp.dot(onehot, table_ref[...], preferred_element_type=jnp.float32)
    out_ref[...] = (acc * scale).astype(out_ref.dtype)


def _resident_lookup(flat, table, *, T, scale, vmem_cap, resident_vmem):
    V, E = (int(table.shape[0]), int(table.shape[1]))
    N = int(flat.shape[0])
    itemsize = jnp.dtype(table.dtype).itemsize
    n_tiles = pl.cdiv(N, T)
    N_pad = n_tiles * T
    ids = flat if N_pad == N else jnp.pad(flat, (0, N_pad - N))
    vmem_limit = int(min(0.8 * vmem_cap, max(32 << 20, resident_vmem + (4 << 20))))

    out = pl.pallas_call(
        functools.partial(_onehot_kernel, scale=scale),
        out_shape=jax.ShapeDtypeStruct((N_pad, E), table.dtype),
        grid_spec=pltpu.PrefetchScalarGridSpec(
            num_scalar_prefetch=0,
            grid=(n_tiles,),
            in_specs=[
                pl.BlockSpec((T, 1), lambda i: (i, 0)),           # token-id tile
                # Constant index_map -> the table is loaded once; single buffer
                # so its VMEM footprint is not doubled.
                pl.BlockSpec((V, E), lambda i: (0, 0),
                             pipeline_mode=pl.Buffered(1)),
            ],
            out_specs=pl.BlockSpec((T, E), lambda i: (i, 0)),
        ),
        compiler_params=pltpu.CompilerParams(
            dimension_semantics=("parallel",),   # independent tiles -> both TCs on v7x
            vmem_limit_bytes=vmem_limit,
        ),
        cost_estimate=pl.CostEstimate(
            flops=int(2 * N_pad * V * E),
            transcendentals=0,
            bytes_accessed=int(V * E * itemsize + N_pad * 4 + N_pad * E * itemsize),
        ),
    )(ids.reshape(N_pad, 1), table)
    return out[:N]


# ---------------------------------------------------------------------------
# Path 2: table in HBM + manual rotating-buffer per-row DMA gather.
# ---------------------------------------------------------------------------
def _gather_kernel(tok_smem, table_hbm, out_ref, buf, sems, *,
                   scale, tile, depth, compute_dtype):
    # tok_smem:  (N_pad,) int32 token ids, scalar-prefetched into SMEM.
    # table_hbm: (V, E) embedding table left in HBM (memory_space=pl.ANY).
    # out_ref:   (T, E) output tile in VMEM.
    # buf:       (depth, T, E) rotating VMEM buffer for the gathered rows.
    # sems:      (depth,) DMA semaphores (one per slot, shared by the T copies).
    c = pl.program_id(0)          # core-split chunk (v7x megacore)
    i = pl.program_id(1)          # tile step within this chunk
    n_inner = pl.num_programs(1)
    base_tile = c * n_inner

    def issue_tile(local_tile, slot):
        row0 = (base_tile + local_tile) * tile

        def issue_row(r, carry):
            tok = tok_smem[row0 + r]
            pltpu.make_async_copy(
                table_hbm.at[pl.ds(tok, 1), :],
                buf.at[slot, pl.ds(r, 1), :],
                sems.at[slot],
            ).start()
            return carry

        # Unrolled so descriptor issue (vector-misc slot + scalar ALUs) stays
        # saturated instead of hiding behind a rolled loop.
        jax.lax.fori_loop(0, tile, issue_row, 0, unroll=8)

    # Prime: on the first step of this chunk, put `depth - 1` tiles in flight.
    # (The wrapper guarantees depth <= n_inner.)
    @pl.when(i == 0)
    def _():
        for t in range(depth - 1):
            issue_tile(t, t)

    # Keep `depth` tiles in flight: issue tile i + depth - 1 into its slot
    # (that slot's previous occupant, tile i - 1, was consumed last step).
    @pl.when(i + (depth - 1) < n_inner)
    def _():
        issue_tile(i + (depth - 1), (i + (depth - 1)) % depth)

    # Aggregated wait: the T per-row copies into slot `cur` total exactly
    # tile*E*itemsize bytes (all row copies are identical size), so a single
    # wait sized like the whole slot covers them — DMA semaphores count bytes.
    cur = i % depth
    pltpu.make_async_copy(buf.at[cur], buf.at[cur], sems.at[cur]).wait()

    # One contiguous scaled (T, E) store.  bf16 epilogue on chips with a bf16
    # VPU (v6e/v7x); f32 otherwise.
    rows = buf[cur].astype(compute_dtype) * jnp.asarray(scale, dtype=compute_dtype)
    out_ref[...] = rows.astype(out_ref.dtype)


def _gather_lookup(ids, table, *, T, scale, compute_dtype, vmem_cap):
    V, E = (int(table.shape[0]), int(table.shape[1]))
    n = int(ids.shape[0])
    itemsize = jnp.dtype(table.dtype).itemsize

    n_tiles = pl.cdiv(n, T)
    core_splits = 2 if n_tiles >= 2 else 1      # v7x: one chunk per TensorCore
    n_inner = pl.cdiv(n_tiles, core_splits)
    n_pad = core_splits * n_inner * T
    if n_pad != n:
        ids = jnp.pad(ids, (0, n_pad - n))
    depth = max(1, min(3, n_inner))              # pipeline depth (<= n_inner)

    scratch_bytes = depth * T * E * itemsize + 2 * T * E * itemsize
    vmem_limit = int(min(0.8 * vmem_cap, max(32 << 20, scratch_bytes + (8 << 20))))

    out = pl.pallas_call(
        functools.partial(_gather_kernel, scale=scale, tile=T, depth=depth,
                          compute_dtype=compute_dtype),
        out_shape=jax.ShapeDtypeStruct((n_pad, E), table.dtype),
        grid_spec=pltpu.PrefetchScalarGridSpec(
            num_scalar_prefetch=1,                           # token ids -> SMEM
            grid=(core_splits, n_inner),
            in_specs=[pl.BlockSpec(memory_space=pl.ANY)],    # table stays in HBM
            out_specs=pl.BlockSpec((T, E),
                                   lambda c, i, tok: (c * n_inner + i, 0)),
            scratch_shapes=[
                pltpu.VMEM((depth, T, E), table.dtype),
                pltpu.SemaphoreType.DMA((depth,)),
            ],
        ),
        compiler_params=pltpu.CompilerParams(
            # Chunk axis parallel (both TCs on v7x); rotating buffer carries
            # across the inner steps.
            dimension_semantics=("parallel", "arbitrary"),
            vmem_limit_bytes=vmem_limit,
        ),
        cost_estimate=pl.CostEstimate(
            flops=int(n_pad * E),
            transcendentals=0,
            bytes_accessed=int(2 * n_pad * E * itemsize + n_pad * 4),
        ),
    )(ids, table)
    return out[:n]


# ---------------------------------------------------------------------------
# Wrapper: TokenEmbedding.forward(tokens) = embedding(tokens) * sqrt(E)
# ---------------------------------------------------------------------------
def token_embedding(tokens, table, *, tile_tokens=None, force_gather=False):
    V, E = (int(table.shape[0]), int(table.shape[1]))
    lead_shape = tuple(int(d) for d in tokens.shape)
    N = 1
    for d in lead_shape:
        N *= d
    if N == 0:
        return jnp.zeros((*lead_shape, E), table.dtype)

    itemsize = jnp.dtype(table.dtype).itemsize
    scale = float(math.sqrt(E))
    gen = _tpu_generation()
    chip = _CHIP_PARAMS[gen]
    vmem_cap = _vmem_capacity_bytes()

    # TODO(synk): nn.Embedding raises on out-of-range ids; we clamp to keep the
    # HBM gather in bounds instead of reproducing the error.
    flat = jnp.clip(tokens.reshape(N).astype(jnp.int32), 0, V - 1)

    # ---- path selection: VMEM-resident one-hot matmul vs HBM DMA gather ----
    if tile_tokens is None:
        T_res = int(chip["resident_tile"])
    else:
        T_res = max(8, (int(tile_tokens) // 8) * 8)
    T_res = min(T_res, ((N + 7) // 8) * 8)

    resident_vmem = (V * E * itemsize              # table (single-buffered)
                     + 2 * T_res * 4               # token-id blocks
                     + 2 * T_res * E * itemsize    # output blocks
                     + T_res * V * itemsize        # one-hot operand
                     + T_res * E * 4               # f32 matmul result
                     + (2 << 20))                  # headroom
    fits_vmem = resident_vmem <= int(0.6 * vmem_cap)
    onehot_s_per_tok = 2.0 * V * E / chip["mxu_flops"]
    gather_s_per_tok = max(E * itemsize / chip["hbm_bw"], _ROW_DMA_FLOOR_S)
    use_resident = ((not force_gather) and fits_vmem
                    and onehot_s_per_tok <= gather_s_per_tok)

    if use_resident:
        out_flat = _resident_lookup(flat, table, T=T_res, scale=scale,
                                    vmem_cap=vmem_cap,
                                    resident_vmem=resident_vmem)
    else:
        if tile_tokens is None:
            T = 256                                # big tiles amortize grid overhead
        else:
            T = max(8, (int(tile_tokens) // 8) * 8)
        T = min(T, ((N + 7) // 8) * 8)
        if table.dtype == jnp.bfloat16 and gen in ("v6", "v7"):
            compute_dtype = jnp.bfloat16           # native bf16 VPU epilogue
        else:
            compute_dtype = jnp.float32
        # Bound the scalar-prefetch SMEM footprint (1-D SMEM pads to pow2 bytes)
        # by chunking the id array across multiple pallas_calls.
        max_ids_per_call = 32768
        pieces = []
        for start in range(0, N, max_ids_per_call):
            pieces.append(
                _gather_lookup(flat[start:start + max_ids_per_call], table,
                               T=T, scale=scale, compute_dtype=compute_dtype,
                               vmem_cap=vmem_cap))
        out_flat = pieces[0] if len(pieces) == 1 else jnp.concatenate(pieces, axis=0)

    return out_flat.reshape(*lead_shape, E)


if __name__ == "__main__":
    key = jax.random.PRNGKey(0)
    k_tok1, k_emb1, k_tok2, k_emb2, k_tok3, k_emb3 = jax.random.split(key, 6)

    # Case 1: small vocab -> resident-table / one-hot MXU path.
    vocab_size, emb_size, batch, seq = 64, 32, 2, 8
    tokens = jax.random.randint(k_tok1, (batch, seq), 0, vocab_size, dtype=jnp.int32)
    table = jax.random.normal(k_emb1, (vocab_size, emb_size), dtype=jnp.float32)

    out = jax.block_until_ready(token_embedding(tokens, table))
    ref = jnp.take(table, tokens, axis=0) * math.sqrt(emb_size)
    assert out.shape == (batch, seq, emb_size)
    assert out.dtype == table.dtype
    assert jnp.allclose(out, ref, atol=1e-3, rtol=1e-3), "one-hot path mismatch"

    # Case 2: forced manual DMA-gather path with small tiles -> exercises the
    # depth-3 rotating buffer, core-split grid, unrolled issue loop, aggregated
    # wait, and tail padding (74 tokens, 16-token tiles).
    vocab2, emb2, batch2, seq2 = 512, 128, 2, 37
    tokens2 = jax.random.randint(k_tok2, (batch2, seq2), 0, vocab2, dtype=jnp.int32)
    table2 = jax.random.normal(k_emb2, (vocab2, emb2), dtype=jnp.float32)

    out2 = jax.block_until_ready(
        token_embedding(tokens2, table2, tile_tokens=16, force_gather=True))
    ref2 = jnp.take(table2, tokens2, axis=0) * math.sqrt(emb2)
    assert out2.shape == (batch2, seq2, emb2)
    assert jnp.allclose(out2, ref2, atol=1e-5, rtol=1e-5), "gather path mismatch"

    # Case 3: forced gather with default (large) tile and a bf16 table ->
    # exercises the single-tile / depth-1 edge and the bf16 epilogue.
    vocab3, emb3, batch3, seq3 = 512, 128, 3, 50
    tokens3 = jax.random.randint(k_tok3, (batch3, seq3), 0, vocab3, dtype=jnp.int32)
    table3 = jax.random.normal(k_emb3, (vocab3, emb3), dtype=jnp.bfloat16)

    out3 = jax.block_until_ready(
        token_embedding(tokens3, table3, force_gather=True))
    ref3 = jnp.take(table3, tokens3, axis=0).astype(jnp.float32) * math.sqrt(emb3)
    assert out3.shape == (batch3, seq3, emb3)
    assert out3.dtype == jnp.bfloat16
    assert jnp.allclose(out3.astype(jnp.float32), ref3, atol=0.5, rtol=2e-2), \
        "bf16 gather path mismatch"

    print("KERNEL_OK")
</pallas_src>

<mosaic_0001>
module attributes {stable_mosaic.version = 11 : i64} {
  func.func @_onehot_kernel(%arg0: i32, %arg1: memref<16x1xi32, #tpu.memory_space<vmem>>, %arg2: memref<64x32xf32, #tpu.memory_space<vmem>>, %arg3: memref<16x32xf32, #tpu.memory_space<vmem>>) attributes {dimension_semantics = [#tpu.dimension_semantics<parallel>], iteration_bounds = array<i64: 1>, scalar_prefetch = 0 : i64, scratch_operands = 0 : i64, tpu.core_type = #tpu.core_type<tc>, window_params = [{transform_indices = @transform_0, window_bounds = array<i64: 16, 1>}, {pipeline_mode = #tpu.pipeline_mode<synchronous>, transform_indices = @transform_1, window_bounds = array<i64: 64, 32>}, {transform_indices = @transform_2, window_bounds = array<i64: 16, 32>}]} {
    %c0 = arith.constant 0 : index
    %c0_0 = arith.constant 0 : index
    %0 = vector.load %arg1[%c0, %c0_0] : memref<16x1xi32, #tpu.memory_space<vmem>>, vector<16x1xi32>
    %1 = tpu.iota {dimensions = array<i32: 1>} : vector<16x64xi32>
    %2 = vector.broadcast %0 : vector<16x1xi32> to vector<16x64xi32>
    %3 = arith.cmpi eq, %2, %1 : vector<16x64xi32>
    %4 = arith.extui %3 : vector<16x64xi1> to vector<16x64xi32>
    %5 = arith.sitofp %4 : vector<16x64xi32> to vector<16x64xf32>
    %c0_1 = arith.constant 0 : index
    %c0_2 = arith.constant 0 : index
    %6 = vector.load %arg2[%c0_1, %c0_2] : memref<64x32xf32, #tpu.memory_space<vmem>>, vector<64x32xf32>
    %cst = arith.constant dense<0.000000e+00> : vector<16x32xf32>
    %7 = tpu.matmul %5, %6, %cst {dimension_numbers = #tpu.dot_dimension_numbers<[1], [0], [0], [1], [0, 0, 1, 1], [], []>} : vector<16x64xf32>, vector<64x32xf32>, vector<16x32xf32> -> vector<16x32xf32>
    %cst_3 = arith.constant 5.65685415 : f32
    %8 = vector.broadcast %cst_3 : f32 to vector<16x32xf32>
    %9 = arith.mulf %7, %8 : vector<16x32xf32>
    %c0_4 = arith.constant 0 : index
    %c0_5 = arith.constant 0 : index
    %10 = vector.load %arg3[%c0_4, %c0_5] : memref<16x32xf32, #tpu.memory_space<vmem>>, vector<16x32xf32>
    tpu.vector_store %arg3[%c0_4, %c0_5], %9 {strides = array<i32>} : memref<16x32xf32, #tpu.memory_space<vmem>>, vector<16x32xf32>,
    return
  }
  func.func @transform_0(%arg0: i32) -> (i32, i32) {
    %c0_i32 = arith.constant 0 : i32
    %c0_i32_0 = arith.constant 0 : i32
    return %arg0, %c0_i32 : i32, i32
  }
  func.func @transform_1(%arg0: i32) -> (i32, i32) {
    %c0_i32 = arith.constant 0 : i32
    %c0_i32_0 = arith.constant 0 : i32
    %c0_i32_1 = arith.constant 0 : i32
    return %c0_i32, %c0_i32_0 : i32, i32
  }
  func.func @transform_2(%arg0: i32) -> (i32, i32) {
    %c0_i32 = arith.constant 0 : i32
    %c0_i32_0 = arith.constant 0 : i32
    return %arg0, %c0_i32 : i32, i32
  }
}

</mosaic_0001>

<llo_original>
// kernel: tpu_custom_call.1
$region0: #{tpu_custom_call.1}
  #allocation0 [shape = 'u32[]', space=smem, size = 0x4, offset = 0x4, fixed_abs, tag = 'smem constant byte address 0x4 - core index']
  #allocation1 [shape = 'u32[144,128]{1,0:T(1,128)}', space=vmem, size = 0x12000, scoped, tag = 'internal scratch']
  %s0 = inlined_call_operand.vmem [shape: s32[16,1], index: 0, kind: input, shape index: {}]
  %s1 = inlined_call_operand.vmem [shape: f32[64,32], index: 1, kind: input, shape index: {}]
  %s2 = inlined_call_operand.hbm [shape: f32[16,32], index: 2, kind: output, shape index: {}]
  %s3 = sld [smem:[#allocation0]]
  $region18: #{tpu_custom_call.1} parent=0
    _
  %s5 = ssub.s32 1, %s3
  %s6 = scalar_select 0, %s5, %s3
  $region1: #{tpu_custom_call.1} parent=0
    #allocation2 [shape = 'u8[8192]{0}', space=vmem, size = 0x2000, scoped, tag = 'output window, operand 0, single buffered']
    #allocation3 [shape = 's32[1]{0}', space=sflag, size = 0x4, scoped, tag = 'scoped memory for tpu_custom_call.1']
    %7 = vsyncpa [#allocation3], 0
    // Predicated region
    $region2: #{tpu_custom_call.1} parent=1 // pred_check
      _
    $region3: #{tpu_custom_call.1} parent=1 // pred_check_branch
      %9 = sbr.rel (0) target = $region5
    $region4: #{tpu_custom_call.1} parent=1 // pred_region
      _
    $region5: #{tpu_custom_call.1} parent=1 // pred_fallthru
      _
    // Predicated region
    $region6: #{tpu_custom_call.1} parent=1 // pred_check
      _
    $region7: #{tpu_custom_call.1} parent=1 // pred_check_branch
      %11 = sbr.rel (0) target = $region9
    $region8: #{tpu_custom_call.1} parent=1 // pred_region
      _
    $region9: #{tpu_custom_call.1} parent=1 // pred_fallthru
      _
    %v12 = vld [vmem:[%s0] sm:$0xff]
    %v13 = vld [vmem:[%s0 + $0x8] sm:$0xff]
    %v14 = vlaneseq
    %v15 = vand.u32 %v14, 127
    %16 = vset.pattern.permute.xlu0 0
    %17 = vperm.xlu0 %16, %v12
    %v18 = vpop.permute.xlu0 %17
    %19 = vset.pattern.permute.xlu0 0
    %20 = vperm.xlu0 %19, %v13
    %v21 = vpop.permute.xlu0 %20
    %vm22 = vcmp.eq.s32.totalorder %v18, %v15
    %vm23 = vcmp.eq.s32.totalorder %v21, %v15
    %v24 = vsel %vm22, 1, 0
    %v25 = vsel %vm23, 1, 0
    %v26 = vcvt.s32.f32 %v24
    %v27 = vcvt.s32.f32 %v25
    %v28 = vld [vmem:[%s1] sm:$0xff]
    %v29 = vld [vmem:[%s1 + $0x8] sm:$0xff]
    %v30 = vld [vmem:[%s1 + $0x10] sm:$0xff]
    %v31 = vld [vmem:[%s1 + $0x18] sm:$0xff]
    %v32 = vld [vmem:[%s1 + $0x20] sm:$0xff]
    %v33 = vld [vmem:[%s1 + $0x28] sm:$0xff]
    %v34 = vld [vmem:[%s1 + $0x30] sm:$0xff]
    %v35 = vld [vmem:[%s1 + $0x38] sm:$0xff]
    %vm36 = vcmask 523264
    %v38 = vsel %vm36, %v26, 0
    %v41 = vsel %vm36, %v27, 0
    %43 = vmatprep.subr.mxu0 0.0
    %44 = vmatpush1.msra.mxu0 0.0
    %45 = vmatprep.subr.mxu0 0.0
    %46 = vmatpush1.msra.mxu0 0.0
    %47 = vmatprep.subr.mxu0 0.0
    %48 = vmatpush1.msra.mxu0 0.0
    %49 = vmatprep.subr.mxu0 0.0
    %50 = vmatpush1.msra.mxu0 0.0
    %51 = vmatprep.subr.mxu0 0.0
    %52 = vmatpush1.msra.mxu0 0.0
    %53 = vmatprep.subr.mxu0 0.0
    %54 = vmatpush1.msra.mxu0 0.0
    %55 = vmatprep.subr.mxu0 0.0
    %56 = vmatpush1.msra.mxu0 0.0
    %57 = vmatprep.subr.mxu0 0.0
    %58 = vmatpush1.msra.mxu0 0.0
    %59 = vmatprep.subr.mxu0 0.0
    %60 = vmatpush1.msra.mxu0 %v35
    %61 = vmatprep.subr.mxu0 0.0
    %62 = vmatpush1.msra.mxu0 %v34
    %63 = vmatprep.subr.mxu0 0.0
    %64 = vmatpush1.msra.mxu0 %v33
    %65 = vmatprep.subr.mxu0 0.0
    %66 = vmatpush1.msra.mxu0 %v32
    %67 = vmatprep.subr.mxu0 0.0
    %68 = vmatpush1.msra.mxu0 %v31
    %69 = vmatprep.subr.mxu0 0.0
    %70 = vmatpush1.msra.mxu0 %v30
    %71 = vmatprep.subr.mxu0 0.0
    %72 = vmatpush1.msra.mxu0 %v29
    %73 = vmatprep.subr.mxu0 0.0
    %74 = vmatpush1.msra.mxu0 %v28
    %75 = vmatprep.subr.mxu0 0.0
    %76 = vmatpush2.msra.mxu0 0.0
    %77 = vmatprep.subr.mxu0 0.0
    %78 = vmatpush2.msra.mxu0 0.0
    %79 = vmatprep.subr.mxu0 0.0
    %80 = vmatpush2.msra.mxu0 0.0
    %81 = vmatprep.subr.mxu0 0.0
    %82 = vmatpush2.msra.mxu0 0.0
    %83 = vmatprep.subr.mxu0 0.0
    %84 = vmatpush2.msra.mxu0 0.0
    %85 = vmatprep.subr.mxu0 0.0
    %86 = vmatpush2.msra.mxu0 0.0
    %87 = vmatprep.subr.mxu0 0.0
    %88 = vmatpush2.msra.mxu0 0.0
    %89 = vmatprep.subr.mxu0 0.0
    %90 = vmatpush2.msra.mxu0 0.0
    %91 = vmatprep.subr.mxu0 0.0
    %92 = vmatpush2.msra.mxu0 0.0
    %93 = vmatprep.subr.mxu0 0.0
    %94 = vmatpush2.msra.mxu0 0.0
    %95 = vmatprep.subr.mxu0 0.0
    %96 = vmatpush2.msra.mxu0 0.0
    %97 = vmatprep.subr.mxu0 0.0
    %98 = vmatpush2.msra.mxu0 0.0
    %99 = vmatprep.subr.mxu0 0.0
    %100 = vmatpush2.msra.mxu0 0.0
    %101 = vmatprep.subr.mxu0 0.0
    %102 = vmatpush2.msra.mxu0 0.0
    %103 = vmatprep.subr.mxu0 0.0
    %104 = vmatpush2.msra.mxu0 0.0
    %105 = vmatprep.subr.mxu0 0.0
    %106 = vmatpush2.msra.mxu0 0.0
    %107 = vmatprep.mubr.f32.mxu0 0.0
    %108 = vmatmul.mubr.f32.gmra.mxu0 %v38
    %v109 = vpop.f32.mrf.mxu0
    %v110 = vadd.f32 0.0, %v109
    %v111 = vpop.f32.mrf.mxu0
    %112 = vmatprep.mubr.f32.mxu0 0.0
    %113 = vmatmul.mubr.f32.gmra.mxu0 %v41
    %v114 = vpop.f32.mrf.mxu0
    %v115 = vadd.f32 0.0, %v114
    %v116 = vpop.f32.mrf.mxu0
    %117 = vdwg.mxu0
    %v118 = vmul.f32 %v110, 5.656854
    %v119 = vmul.f32 %v115, 5.656854
    %vm120 = vcmask 261120
    %121 = vst.msk [vmem:[#allocation2] sm:$0xff] %vm120, %v118
    %122 = vst.msk [vmem:[#allocation2 + $0x8] sm:$0xff] %vm120, %v119
    // Predicated region
    $region10: #{tpu_custom_call.1} parent=1 // pred_check
      _
    $region11: #{tpu_custom_call.1} parent=1 // pred_check_branch
      %124 = sbr.rel (0) target = $region13
    $region12: #{tpu_custom_call.1} parent=1 // pred_region
      %s126 = ssub.s32 256, 256
      %127 = vsyncadd [#allocation3], %s126
      %s128 = sshll.u32 [#allocation2], 4
      %s129 = int_to_ptr.vmem [resolvable:$true] %s128
      %134 = dma.vmem_to_hbm [thread:$0]  %s129, 256, %s2, [#allocation3], 128, 128, 8
    $region13: #{tpu_custom_call.1} parent=1 // pred_fallthru
      _
    // Predicated region
    $region14: #{tpu_custom_call.1} parent=1 // pred_check
      _
    $region15: #{tpu_custom_call.1} parent=1 // pred_check_branch
      %136 = sbr.rel (0) target = $region17
    $region16: #{tpu_custom_call.1} parent=1 // pred_region
      %137 = dma.done [#allocation3], 256
    $region17: #{tpu_custom_call.1} parent=1 // pred_fallthru
      _
    %138 = vsyncpa [#allocation3], 1

</llo_original>
